<compile_context>
chip_gen: v7x
topology: tpu7x:2x2x1
jax: 0.10.0
libtpu: 0.0.40
codegen_flags: <defaults>
</compile_context>

<pallas_src>
import jax
import jax.numpy as jnp
from jax.experimental import pallas as pl
from jax.experimental.pallas import tpu as pltpu


def _round_up(x, m):
    return (x + m - 1) // m * m


# ----------------------------- Pallas kernel --------------------------------
def _make_fused_mlp_kernel(relu_flags, out_pads, compute_dtype):
    """x -> [Linear(+ReLU)] * n, entirely in VMEM.

    Ref order: (x_ref, w0_ref, ..., w{n-1}_ref, b_stack_ref, o_ref).
    """
    n_layers = len(relu_flags)

    def kernel(*refs):
        x_ref = refs[0]
        w_refs = refs[1:1 + n_layers]
        b_ref = refs[1 + n_layers]
        o_ref = refs[2 + n_layers]

        b_all = b_ref[...]                        # (n_layers, d_max_pad) f32, tiny
        h = x_ref[...].astype(jnp.float32)        # f32 working activation
        for i in range(n_layers):
            # MXU matmul: bf16 operands, f32 accumulation.
            h = jnp.dot(h.astype(compute_dtype), w_refs[i][...],
                        preferred_element_type=jnp.float32)
            # Bias + ReLU epilogue in f32 (keeps v5e's VALU path clean).
            h = h + b_all[i, :out_pads[i]]
            if relu_flags[i]:
                h = jnp.maximum(h, 0.0)
        o_ref[...] = h.astype(o_ref.dtype)

    return kernel


# --------------------------- one-time param prep -----------------------------
def prepare_mlp_params(params, *, compute_dtype=jnp.bfloat16):
    """One-time (cacheable) prep: lane-pad & cast weights, stack biases.

    params: list of (W [D_in, D_out] f32, b [1, D_out] f32, relu_flag).
    Returns a dict consumed by mlp_forward; do this ONCE, not per call.
    """
    d_in = params[0][0].shape[0]
    d_in_pad = _round_up(d_in, 128)

    w_padded, b_rows, relu_flags, out_pads = [], [], [], []
    prev_pad = d_in_pad
    for w, b, relu in params:
        di, do = w.shape
        do_pad = _round_up(do, 128)
        w_p = jnp.zeros((prev_pad, do_pad), jnp.float32).at[:di, :do].set(w)
        w_padded.append(w_p.astype(compute_dtype))
        b_rows.append(jnp.zeros((do_pad,), jnp.float32).at[:do].set(b[0]))
        relu_flags.append(bool(relu))
        out_pads.append(do_pad)
        prev_pad = do_pad

    d_max_pad = max(out_pads)
    b_stack = jnp.zeros((len(params), d_max_pad), jnp.float32)
    for i, row in enumerate(b_rows):
        b_stack = b_stack.at[i, :row.shape[0]].set(row)

    return dict(
        w_padded=tuple(w_padded),
        b_stack=b_stack,
        relu_flags=tuple(relu_flags),
        out_pads=tuple(out_pads),
        d_in=d_in,
        d_in_pad=d_in_pad,
        d_out=params[-1][0].shape[1],
        d_out_pad=out_pads[-1],
        compute_dtype=compute_dtype,
    )


# ------------------------------- forward pass --------------------------------
def mlp_forward(obs, prep, *, batch_tile=256):
    """obs: [B, D_in] f32.  prep: prepare_mlp_params(...) output.  -> [B, n_out]."""
    B, d_in = obs.shape
    assert d_in == prep["d_in"]
    d_in_pad, d_out_pad = prep["d_in_pad"], prep["d_out_pad"]
    w_padded, b_stack = prep["w_padded"], prep["b_stack"]

    # Batch tile: fill the MXU M-dim when B allows (multiple of 8, up to
    # batch_tile); >1 grid step for large B so "parallel" can shard across
    # both v7x TensorCores.  At tiny B this is a single (B_pad, *) tile.
    B8 = _round_up(B, 8)
    if B8 <= batch_tile:
        tile_b = B8
        B_pad = B8
    else:
        tile_b = batch_tile                        # multiple of 128
        B_pad = _round_up(B8, tile_b)

    # Only the obs padding stays in the hot path (weights/biases pre-padded).
    x_p = jnp.zeros((B_pad, d_in_pad), obs.dtype).at[:B, :d_in].set(obs)

    kernel = _make_fused_mlp_kernel(prep["relu_flags"], prep["out_pads"],
                                    prep["compute_dtype"])

    in_specs = [pl.BlockSpec((tile_b, d_in_pad), lambda i: (i, 0))]
    flat_inputs = [x_p]
    for w_p in w_padded:
        # Tiny weights, constant block index -> VMEM-resident across grid steps.
        in_specs.append(pl.BlockSpec(w_p.shape, lambda i: (0, 0)))
        flat_inputs.append(w_p)
    in_specs.append(pl.BlockSpec(b_stack.shape, lambda i: (0, 0)))
    flat_inputs.append(b_stack)

    # --- explicit VMEM budget (v7x: 64 MiB physical, 32 MiB default scoped) ---
    x_tile_bytes = tile_b * d_in_pad * x_p.dtype.itemsize
    o_tile_bytes = tile_b * d_out_pad * x_p.dtype.itemsize
    w_bytes = sum(w.size * w.dtype.itemsize for w in w_padded)
    b_bytes = _round_up(b_stack.shape[0], 8) * b_stack.shape[1] * 4
    act_bytes = 4 * tile_b * max(prep["out_pads"] + (d_in_pad,)) * 4  # h workspace
    vmem_budget = 2 * (x_tile_bytes + o_tile_bytes + w_bytes + b_bytes) + act_bytes
    vmem_limit = int(min(max(2 * vmem_budget, 16 << 20), 64 << 20))

    flops = 2 * B_pad * sum(w.shape[0] * w.shape[1] for w in w_padded)
    bytes_accessed = (x_p.size * x_p.dtype.itemsize
                      + w_bytes
                      + b_stack.size * b_stack.dtype.itemsize
                      + B_pad * d_out_pad * x_p.dtype.itemsize)

    out = pl.pallas_call(
        kernel,
        out_shape=jax.ShapeDtypeStruct((B_pad, d_out_pad), obs.dtype),
        grid=(B_pad // tile_b,),
        in_specs=in_specs,
        out_specs=pl.BlockSpec((tile_b, d_out_pad), lambda i: (i, 0)),
        compiler_params=pltpu.CompilerParams(
            dimension_semantics=("parallel",),
            vmem_limit_bytes=vmem_limit),
        cost_estimate=pl.CostEstimate(
            flops=flops, transcendentals=0, bytes_accessed=bytes_accessed),
    )(*flat_inputs)

    return out[:B, :prep["d_out"]]


# --------------------------- parameter init ----------------------------------
def orthogonal_init(key, shape, gain):
    """Deterministic emulation of torch.nn.init.orthogonal_ (shape = (out, in))."""
    rows, cols = shape
    a = jax.random.normal(key, (max(rows, cols), min(rows, cols)), dtype=jnp.float32)
    q, r = jnp.linalg.qr(a)
    d = jnp.diag(r)
    q = q * jnp.where(d == 0, 1.0, jnp.sign(d))   # sign(0) -> +1 guard
    if rows < cols:
        q = q.T
    return gain * q[:rows, :cols]


def make_mlp_params(key, n_inputs, hiddens, n_outputs, gain=3.0):
    """Returns list of (W [D_in, D_out], b [1, D_out], relu_flag)."""
    params = []
    d_in = n_inputs
    dims = list(hiddens) + ([n_outputs] if n_outputs is not None else [])
    for i, d_out in enumerate(dims):
        key, sub = jax.random.split(key)
        w_torch = orthogonal_init(sub, (d_out, d_in), gain)   # PyTorch layout [out, in]
        w = jnp.asarray(w_torch).T                            # kernel layout [in, out]
        b = jnp.zeros((1, d_out), jnp.float32)
        is_hidden = i < len(hiddens)
        params.append((w, b, is_hidden))
        d_in = d_out
    return params


# --------------------------------- main --------------------------------------
if __name__ == "__main__":
    key = jax.random.PRNGKey(0)

    # observation_space.shape == (obs_dim,) ; small shapes consistent with the module
    batch = 4
    obs_dim = 16
    hiddens = [32, 32]
    n_outputs = 8

    k_params, k_obs = jax.random.split(key)
    params = make_mlp_params(k_params, obs_dim, hiddens, n_outputs, gain=3.0)
    obs = jax.random.normal(k_obs, (batch, obs_dim), dtype=jnp.float32)

    # One-time parameter prep (lane-padded bf16 weights, stacked f32 biases);
    # this is the piece hoisted out of the per-call hot path.
    prep = prepare_mlp_params(params, compute_dtype=jnp.bfloat16)

    out = mlp_forward(obs, prep)
    out = jax.block_until_ready(out)

    # pure-JAX reference with matching precision (bf16 operands, f32 accum,
    # f32 bias/ReLU epilogue) of the same math
    ref = obs
    for w, b, relu in params:
        ref = jnp.dot(ref.astype(jnp.bfloat16), w.astype(jnp.bfloat16),
                      preferred_element_type=jnp.float32) + b
        if relu:
            ref = jnp.maximum(ref, 0.0)
    assert out.shape == (batch, n_outputs)
    assert jnp.allclose(out, ref, atol=1e-3, rtol=1e-3), (
        float(jnp.max(jnp.abs(out - ref))))

    print("KERNEL_OK")
</pallas_src>

<mosaic_0001>
module attributes {stable_mosaic.version = 11 : i64} {
  func.func @kernel(%arg0: i32, %arg1: memref<8x128xf32, #tpu.memory_space<vmem>>, %arg2: memref<128x128xbf16, #tpu.memory_space<vmem>>, %arg3: memref<128x128xbf16, #tpu.memory_space<vmem>>, %arg4: memref<128x128xbf16, #tpu.memory_space<vmem>>, %arg5: memref<3x128xf32, #tpu.memory_space<vmem>>, %arg6: memref<8x128xf32, #tpu.memory_space<vmem>>) attributes {dimension_semantics = [#tpu.dimension_semantics<parallel>], iteration_bounds = array<i64: 1>, scalar_prefetch = 0 : i64, scratch_operands = 0 : i64, tpu.core_type = #tpu.core_type<tc>, window_params = [{transform_indices = @transform_0, window_bounds = array<i64: 8, 128>}, {pipeline_mode = #tpu.pipeline_mode<synchronous>, transform_indices = @transform_1, window_bounds = array<i64: 128, 128>}, {pipeline_mode = #tpu.pipeline_mode<synchronous>, transform_indices = @transform_2, window_bounds = array<i64: 128, 128>}, {pipeline_mode = #tpu.pipeline_mode<synchronous>, transform_indices = @transform_3, window_bounds = array<i64: 128, 128>}, {pipeline_mode = #tpu.pipeline_mode<synchronous>, transform_indices = @transform_4, window_bounds = array<i64: 3, 128>}, {transform_indices = @transform_5, window_bounds = array<i64: 8, 128>}]} {
    %c0 = arith.constant 0 : index
    %c0_0 = arith.constant 0 : index
    %0 = vector.load %arg5[%c0, %c0_0] : memref<3x128xf32, #tpu.memory_space<vmem>>, vector<3x128xf32>
    %c0_1 = arith.constant 0 : index
    %c0_2 = arith.constant 0 : index
    %1 = vector.load %arg1[%c0_1, %c0_2] : memref<8x128xf32, #tpu.memory_space<vmem>>, vector<8x128xf32>
    %2 = arith.truncf %1 : vector<8x128xf32> to vector<8x128xbf16>
    %c0_3 = arith.constant 0 : index
    %c0_4 = arith.constant 0 : index
    %3 = vector.load %arg2[%c0_3, %c0_4] : memref<128x128xbf16, #tpu.memory_space<vmem>>, vector<128x128xbf16>
    %cst = arith.constant dense<0.000000e+00> : vector<8x128xf32>
    %4 = tpu.matmul %2, %3, %cst {dimension_numbers = #tpu.dot_dimension_numbers<[1], [0], [0], [1], [0, 0, 1, 1], [], []>} : vector<8x128xbf16>, vector<128x128xbf16>, vector<8x128xf32> -> vector<8x128xf32>
    %5 = vector.extract_strided_slice %0 {offsets = [0, 0], sizes = [1, 128], strides = [1, 1]} : vector<3x128xf32> to vector<1x128xf32>
    %6 = vector.shape_cast %5 : vector<1x128xf32> to vector<128xf32>
    %7 = vector.shape_cast %6 : vector<128xf32> to vector<1x128xf32>
    %8 = vector.broadcast %7 : vector<1x128xf32> to vector<8x128xf32>
    %9 = arith.addf %4, %8 : vector<8x128xf32>
    %cst_5 = arith.constant 0.000000e+00 : f32
    %10 = vector.broadcast %cst_5 : f32 to vector<8x128xf32>
    %11 = arith.maximumf %9, %10 : vector<8x128xf32>
    %12 = arith.truncf %11 : vector<8x128xf32> to vector<8x128xbf16>
    %c0_6 = arith.constant 0 : index
    %c0_7 = arith.constant 0 : index
    %13 = vector.load %arg3[%c0_6, %c0_7] : memref<128x128xbf16, #tpu.memory_space<vmem>>, vector<128x128xbf16>
    %cst_8 = arith.constant dense<0.000000e+00> : vector<8x128xf32>
    %14 = tpu.matmul %12, %13, %cst_8 {dimension_numbers = #tpu.dot_dimension_numbers<[1], [0], [0], [1], [0, 0, 1, 1], [], []>} : vector<8x128xbf16>, vector<128x128xbf16>, vector<8x128xf32> -> vector<8x128xf32>
    %15 = vector.extract_strided_slice %0 {offsets = [1, 0], sizes = [1, 128], strides = [1, 1]} : vector<3x128xf32> to vector<1x128xf32>
    %16 = vector.shape_cast %15 : vector<1x128xf32> to vector<128xf32>
    %17 = vector.shape_cast %16 : vector<128xf32> to vector<1x128xf32>
    %18 = vector.broadcast %17 : vector<1x128xf32> to vector<8x128xf32>
    %19 = arith.addf %14, %18 : vector<8x128xf32>
    %cst_9 = arith.constant 0.000000e+00 : f32
    %20 = vector.broadcast %cst_9 : f32 to vector<8x128xf32>
    %21 = arith.maximumf %19, %20 : vector<8x128xf32>
    %22 = arith.truncf %21 : vector<8x128xf32> to vector<8x128xbf16>
    %c0_10 = arith.constant 0 : index
    %c0_11 = arith.constant 0 : index
    %23 = vector.load %arg4[%c0_10, %c0_11] : memref<128x128xbf16, #tpu.memory_space<vmem>>, vector<128x128xbf16>
    %cst_12 = arith.constant dense<0.000000e+00> : vector<8x128xf32>
    %24 = tpu.matmul %22, %23, %cst_12 {dimension_numbers = #tpu.dot_dimension_numbers<[1], [0], [0], [1], [0, 0, 1, 1], [], []>} : vector<8x128xbf16>, vector<128x128xbf16>, vector<8x128xf32> -> vector<8x128xf32>
    %25 = vector.extract_strided_slice %0 {offsets = [2, 0], sizes = [1, 128], strides = [1, 1]} : vector<3x128xf32> to vector<1x128xf32>
    %26 = vector.shape_cast %25 : vector<1x128xf32> to vector<128xf32>
    %27 = vector.shape_cast %26 : vector<128xf32> to vector<1x128xf32>
    %28 = vector.broadcast %27 : vector<1x128xf32> to vector<8x128xf32>
    %29 = arith.addf %24, %28 : vector<8x128xf32>
    %c0_13 = arith.constant 0 : index
    %c0_14 = arith.constant 0 : index
    %30 = vector.load %arg6[%c0_13, %c0_14] : memref<8x128xf32, #tpu.memory_space<vmem>>, vector<8x128xf32>
    tpu.vector_store %arg6[%c0_13, %c0_14], %29 {strides = array<i32>} : memref<8x128xf32, #tpu.memory_space<vmem>>, vector<8x128xf32>,
    return
  }
  func.func @transform_0(%arg0: i32) -> (i32, i32) {
    %c0_i32 = arith.constant 0 : i32
    %c0_i32_0 = arith.constant 0 : i32
    return %arg0, %c0_i32 : i32, i32
  }
  func.func @transform_1(%arg0: i32) -> (i32, i32) {
    %c0_i32 = arith.constant 0 : i32
    %c0_i32_0 = arith.constant 0 : i32
    %c0_i32_1 = arith.constant 0 : i32
    return %c0_i32, %c0_i32_0 : i32, i32
  }
  func.func @transform_2(%arg0: i32) -> (i32, i32) {
    %c0_i32 = arith.constant 0 : i32
    %c0_i32_0 = arith.constant 0 : i32
    %c0_i32_1 = arith.constant 0 : i32
    return %c0_i32, %c0_i32_0 : i32, i32
  }
  func.func @transform_3(%arg0: i32) -> (i32, i32) {
    %c0_i32 = arith.constant 0 : i32
    %c0_i32_0 = arith.constant 0 : i32
    %c0_i32_1 = arith.constant 0 : i32
    return %c0_i32, %c0_i32_0 : i32, i32
  }
  func.func @transform_4(%arg0: i32) -> (i32, i32) {
    %c0_i32 = arith.constant 0 : i32
    %c0_i32_0 = arith.constant 0 : i32
    %c0_i32_1 = arith.constant 0 : i32
    return %c0_i32, %c0_i32_0 : i32, i32
  }
  func.func @transform_5(%arg0: i32) -> (i32, i32) {
    %c0_i32 = arith.constant 0 : i32
    %c0_i32_0 = arith.constant 0 : i32
    return %arg0, %c0_i32 : i32, i32
  }
}

</mosaic_0001>

<llo_original>
// kernel: tpu_custom_call.1
$region0: #{tpu_custom_call.1}
  #allocation0 [shape = 'u32[]', space=smem, size = 0x4, offset = 0x4, fixed_abs, tag = 'smem constant byte address 0x4 - core index']
  #allocation1 [shape = 'u32[144,128]{1,0:T(1,128)}', space=vmem, size = 0x12000, scoped, tag = 'internal scratch']
  %s0 = inlined_call_operand.hbm [shape: f32[8,128], index: 0, kind: input, shape index: {}]
  %s1 = inlined_call_operand.hbm [shape: bf16[128,128], index: 1, kind: input, shape index: {}]
  %s2 = inlined_call_operand.hbm [shape: bf16[128,128], index: 2, kind: input, shape index: {}]
  %s3 = inlined_call_operand.hbm [shape: bf16[128,128], index: 3, kind: input, shape index: {}]
  %s4 = inlined_call_operand.vmem [shape: f32[3,128], index: 4, kind: input, shape index: {}]
  %s5 = inlined_call_operand.hbm [shape: f32[8,128], index: 5, kind: output, shape index: {}]
  %s6 = sld [smem:[#allocation0]]
  $region46: #{tpu_custom_call.1} parent=0
    _
  %s8 = ssub.s32 1, %s6
  %s9 = scalar_select 0, %s8, %s6
  $region1: #{tpu_custom_call.1} parent=0
    #allocation2 [shape = 'u8[4096]{0}', space=vmem, size = 0x1000, scoped, tag = 'input window, operand 0, single buffered']
    #allocation3 [shape = 's32[1]{0}', space=sflag, size = 0x4, scoped, tag = 'scoped memory for tpu_custom_call.1']
    #allocation4 [shape = 's32[1]{0}', space=sflag, size = 0x4, scoped, tag = 'scoped memory for tpu_custom_call.1']
    #allocation5 [shape = 'u8[32768]{0}', space=vmem, size = 0x8000, scoped, tag = 'input window, operand 1, single buffered']
    #allocation6 [shape = 's32[1]{0}', space=sflag, size = 0x4, scoped, tag = 'scoped memory for tpu_custom_call.1']
    #allocation7 [shape = 'u8[32768]{0}', space=vmem, size = 0x8000, scoped, tag = 'input window, operand 2, single buffered']
    #allocation8 [shape = 'u8[32768]{0}', space=vmem, size = 0x8000, scoped, tag = 'input window, operand 3, single buffered']
    #allocation9 [shape = 's32[1]{0}', space=sflag, size = 0x4, scoped, tag = 'scoped memory for tpu_custom_call.1']
    #allocation10 [shape = 'u8[4096]{0}', space=vmem, size = 0x1000, scoped, tag = 'output window, operand 0, single buffered']
    %10 = vsyncpa [#allocation3], 0
    %11 = vsyncpa [#allocation6], 0
    %12 = vsyncpa [#allocation9], 0
    %13 = vsyncpa [#allocation4], 0
    // Predicated region
    $region2: #{tpu_custom_call.1} parent=1 // pred_check
      _
    $region3: #{tpu_custom_call.1} parent=1 // pred_check_branch
      %15 = sbr.rel (0) target = $region5
    $region4: #{tpu_custom_call.1} parent=1 // pred_region
      %s17 = ssub.s32 128, 128
      %18 = vsyncadd [#allocation3], %s17
      %s20 = sshll.u32 [#allocation2], 4
      %s21 = int_to_ptr.vmem [resolvable:$true] %s20
      %23 = dma.hbm_to_vmem [thread:$0]  %s0, 128, %s21, [#allocation3]
    $region5: #{tpu_custom_call.1} parent=1 // pred_fallthru
      _
    // Predicated region
    $region6: #{tpu_custom_call.1} parent=1 // pred_check
      _
    $region7: #{tpu_custom_call.1} parent=1 // pred_check_branch
      %25 = sbr.rel (0) target = $region9
    $region8: #{tpu_custom_call.1} parent=1 // pred_region
      %s27 = ssub.s32 1024, 1024
      %28 = vsyncadd [#allocation6], %s27
      %s29 = sshll.u32 [#allocation5], 4
      %s30 = int_to_ptr.vmem [resolvable:$true] %s29
      %35 = dma.hbm_to_vmem [thread:$0]  %s1, 1024, %s30, [#allocation6], 64, 64, 4
    $region9: #{tpu_custom_call.1} parent=1 // pred_fallthru
      _
    // Predicated region
    $region10: #{tpu_custom_call.1} parent=1 // pred_check
      _
    $region11: #{tpu_custom_call.1} parent=1 // pred_check_branch
      %37 = sbr.rel (0) target = $region13
    $region12: #{tpu_custom_call.1} parent=1 // pred_region
      %s39 = ssub.s32 1024, 1024
      %40 = vsyncadd [#allocation6], %s39
      %s41 = sshll.u32 [#allocation7], 4
      %s42 = int_to_ptr.vmem [resolvable:$true] %s41
      %47 = dma.hbm_to_vmem [thread:$0]  %s2, 1024, %s42, [#allocation6], 64, 64, 4
    $region13: #{tpu_custom_call.1} parent=1 // pred_fallthru
      _
    // Predicated region
    $region14: #{tpu_custom_call.1} parent=1 // pred_check
      _
    $region15: #{tpu_custom_call.1} parent=1 // pred_check_branch
      %49 = sbr.rel (0) target = $region17
    $region16: #{tpu_custom_call.1} parent=1 // pred_region
      %s51 = ssub.s32 1024, 1024
      %52 = vsyncadd [#allocation9], %s51
      %s53 = sshll.u32 [#allocation8], 4
      %s54 = int_to_ptr.vmem [resolvable:$true] %s53
      %59 = dma.hbm_to_vmem [thread:$0]  %s3, 1024, %s54, [#allocation9], 64, 64, 4
    $region17: #{tpu_custom_call.1} parent=1 // pred_fallthru
      _
    // Predicated region
    $region18: #{tpu_custom_call.1} parent=1 // pred_check
      _
    $region19: #{tpu_custom_call.1} parent=1 // pred_check_branch
      %61 = sbr.rel (0) target = $region21
    $region20: #{tpu_custom_call.1} parent=1 // pred_region
      _
    $region21: #{tpu_custom_call.1} parent=1 // pred_fallthru
      _
    // Predicated region
    $region22: #{tpu_custom_call.1} parent=1 // pred_check
      _
    $region23: #{tpu_custom_call.1} parent=1 // pred_check_branch
      %63 = sbr.rel (0) target = $region25
    $region24: #{tpu_custom_call.1} parent=1 // pred_region
      %64 = dma.done [#allocation3], 128
    $region25: #{tpu_custom_call.1} parent=1 // pred_fallthru
      _
    // Predicated region
    $region26: #{tpu_custom_call.1} parent=1 // pred_check
      _
    $region27: #{tpu_custom_call.1} parent=1 // pred_check_branch
      %66 = sbr.rel (0) target = $region29
    $region28: #{tpu_custom_call.1} parent=1 // pred_region
      %67 = dma.done [#allocation6], 1024
    $region29: #{tpu_custom_call.1} parent=1 // pred_fallthru
      _
    // Predicated region
    $region30: #{tpu_custom_call.1} parent=1 // pred_check
      _
    $region31: #{tpu_custom_call.1} parent=1 // pred_check_branch
      %69 = sbr.rel (0) target = $region33
    $region32: #{tpu_custom_call.1} parent=1 // pred_region
      %70 = dma.done [#allocation6], 1024
    $region33: #{tpu_custom_call.1} parent=1 // pred_fallthru
      _
    // Predicated region
    $region34: #{tpu_custom_call.1} parent=1 // pred_check
      _
    $region35: #{tpu_custom_call.1} parent=1 // pred_check_branch
      %72 = sbr.rel (0) target = $region37
    $region36: #{tpu_custom_call.1} parent=1 // pred_region
      %73 = dma.done [#allocation9], 1024
    $region37: #{tpu_custom_call.1} parent=1 // pred_fallthru
      _
    %v75 = vld [vmem:[%s4] sm:$0x7]
    %v76 = vld [vmem:[#allocation2] sm:$0xff]
    %v77 = vpack.c.bf16 %v76, %v76
    %v78 = vld [vmem:[#allocation5] sm:$0xf]
    %v79 = vld [vmem:[#allocation5 + $0x4] sm:$0xf]
    %v80 = vld [vmem:[#allocation5 + $0x8] sm:$0xf]
    %v81 = vld [vmem:[#allocation5 + $0xc] sm:$0xf]
    %v82 = vld [vmem:[#allocation5 + $0x10] sm:$0xf]
    %v83 = vld [vmem:[#allocation5 + $0x14] sm:$0xf]
    %v84 = vld [vmem:[#allocation5 + $0x18] sm:$0xf]
    %v85 = vld [vmem:[#allocation5 + $0x1c] sm:$0xf]
    %v86 = vld [vmem:[#allocation5 + $0x20] sm:$0xf]
    %v87 = vld [vmem:[#allocation5 + $0x24] sm:$0xf]
    %v88 = vld [vmem:[#allocation5 + $0x28] sm:$0xf]
    %v89 = vld [vmem:[#allocation5 + $0x2c] sm:$0xf]
    %v90 = vld [vmem:[#allocation5 + $0x30] sm:$0xf]
    %v91 = vld [vmem:[#allocation5 + $0x34] sm:$0xf]
    %v92 = vld [vmem:[#allocation5 + $0x38] sm:$0xf]
    %v93 = vld [vmem:[#allocation5 + $0x3c] sm:$0xf]
    %v94 = vlaneseq
    %v95 = vshrl.u32 %v94, 7
    %v96 = vsub.s32 0, %v95
    %v97 = vrot.slane %v75, %v96
    %v114 = vunpack.c.l.b16 %v78
    %v115 = vunpack.c.l.b16 %v79
    %v116 = vunpack.c.l.b16 %v80
    %v117 = vunpack.c.l.b16 %v81
    %v118 = vunpack.c.l.b16 %v82
    %v119 = vunpack.c.l.b16 %v83
    %v120 = vunpack.c.l.b16 %v84
    %v121 = vunpack.c.l.b16 %v85
    %v122 = vunpack.c.l.b16 %v86
    %v123 = vunpack.c.l.b16 %v87
    %v124 = vunpack.c.l.b16 %v88
    %v125 = vunpack.c.l.b16 %v89
    %v126 = vunpack.c.l.b16 %v90
    %v127 = vunpack.c.l.b16 %v91
    %v128 = vunpack.c.l.b16 %v92
    %v129 = vunpack.c.l.b16 %v93
    %v130 = vpack.c.b16 %v115, %v114
    %v131 = vpack.c.b16 %v117, %v116
    %v132 = vpack.c.b16 %v119, %v118
    %v133 = vpack.c.b16 %v121, %v120
    %v134 = vpack.c.b16 %v123, %v122
    %v135 = vpack.c.b16 %v125, %v124
    %v136 = vpack.c.b16 %v127, %v126
    %v137 = vpack.c.b16 %v129, %v128
    %146 = vmatprep.subr.bf16.mxu0 0
    %147 = vmatpush1.bf16.msra.mxu0 %v130
    %148 = vmatprep.subr.bf16.mxu0 0
    %149 = vmatpush1.bf16.msra.mxu0 %v131
    %150 = vmatprep.subr.bf16.mxu0 0
    %151 = vmatpush1.bf16.msra.mxu0 %v132
    %152 = vmatprep.subr.bf16.mxu0 0
    %153 = vmatpush1.bf16.msra.mxu0 %v133
    %154 = vmatprep.subr.bf16.mxu0 0
    %155 = vmatpush1.bf16.msra.mxu0 %v134
    %156 = vmatprep.subr.bf16.mxu0 0
    %157 = vmatpush1.bf16.msra.mxu0 %v135
    %158 = vmatprep.subr.bf16.mxu0 0
    %159 = vmatpush1.bf16.msra.mxu0 %v136
    %160 = vmatprep.subr.bf16.mxu0 0
    %161 = vmatpush1.bf16.msra.mxu0 %v137
    %162 = vmatprep.subr.bf16.mxu0 0
    %163 = vmatpush1.bf16.msra.mxu0 0
    %164 = vmatprep.subr.bf16.mxu0 0
    %165 = vmatpush1.bf16.msra.mxu0 0
    %166 = vmatprep.subr.bf16.mxu0 0
    %167 = vmatpush1.bf16.msra.mxu0 0
    %168 = vmatprep.subr.bf16.mxu0 0
    %169 = vmatpush1.bf16.msra.mxu0 0
    %170 = vmatprep.subr.bf16.mxu0 0
    %171 = vmatpush1.bf16.msra.mxu0 0
    %172 = vmatprep.subr.bf16.mxu0 0
    %173 = vmatpush1.bf16.msra.mxu0 0
    %174 = vmatprep.subr.bf16.mxu0 0
    %175 = vmatpush1.bf16.msra.mxu0 0
    %176 = vmatprep.subr.bf16.mxu0 0
    %177 = vmatpush1.bf16.msra.mxu0 0
    %178 = vmatprep.mubr.bf16.mxu0 0
    %179 = vmatmul.mubr.bf16.gmra.mrb[0].mxu0 %v77
    %v180 = vpop.f32.mrb[0].mxu0
    %v181 = vadd.f32 %v97, %v180
    %v182 = vpop.f32.mrb[0].mxu0
    %v183 = vpop.f32.mrb[0].mxu0
    %v184 = vpop.f32.mrb[0].mxu0
    %185 = vdwg.mxu0
    %v186 = vmax.f32 %v181, 0.0
    %v187 = vpack.c.bf16 %v186, %v186
    %v188 = vld [vmem:[#allocation7] sm:$0xf]
    %v189 = vld [vmem:[#allocation7 + $0x4] sm:$0xf]
    %v190 = vld [vmem:[#allocation7 + $0x8] sm:$0xf]
    %v191 = vld [vmem:[#allocation7 + $0xc] sm:$0xf]
    %v192 = vld [vmem:[#allocation7 + $0x10] sm:$0xf]
    %v193 = vld [vmem:[#allocation7 + $0x14] sm:$0xf]
    %v194 = vld [vmem:[#allocation7 + $0x18] sm:$0xf]
    %v195 = vld [vmem:[#allocation7 + $0x1c] sm:$0xf]
    %v196 = vld [vmem:[#allocation7 + $0x20] sm:$0xf]
    %v197 = vld [vmem:[#allocation7 + $0x24] sm:$0xf]
    %v198 = vld [vmem:[#allocation7 + $0x28] sm:$0xf]
    %v199 = vld [vmem:[#allocation7 + $0x2c] sm:$0xf]
    %v200 = vld [vmem:[#allocation7 + $0x30] sm:$0xf]
    %v201 = vld [vmem:[#allocation7 + $0x34] sm:$0xf]
    %v202 = vld [vmem:[#allocation7 + $0x38] sm:$0xf]
    %v203 = vld [vmem:[#allocation7 + $0x3c] sm:$0xf]
    %v204 = vlaneseq
    %v205 = vshrl.u32 %v204, 7
    %v206 = vsub.s32 1, %v205
    %v207 = vrot.slane %v75, %v206
    %v224 = vunpack.c.l.b16 %v188
    %v225 = vunpack.c.l.b16 %v189
    %v226 = vunpack.c.l.b16 %v190
    %v227 = vunpack.c.l.b16 %v191
    %v228 = vunpack.c.l.b16 %v192
    %v229 = vunpack.c.l.b16 %v193
    %v230 = vunpack.c.l.b16 %v194
    %v231 = vunpack.c.l.b16 %v195
    %v232 = vunpack.c.l.b16 %v196
    %v233 = vunpack.c.l.b16 %v197
    %v234 = vunpack.c.l.b16 %v198
    %v235 = vunpack.c.l.b16 %v199
    %v236 = vunpack.c.l.b16 %v200
    %v237 = vunpack.c.l.b16 %v201
    %v238 = vunpack.c.l.b16 %v202
    %v239 = vunpack.c.l.b16 %v203
    %v240 = vpack.c.b16 %v225, %v224
    %v241 = vpack.c.b16 %v227, %v226
    %v242 = vpack.c.b16 %v229, %v228
    %v243 = vpack.c.b16 %v231, %v230
    %v244 = vpack.c.b16 %v233, %v232
    %v245 = vpack.c.b16 %v235, %v234
    %v246 = vpack.c.b16 %v237, %v236
    %v247 = vpack.c.b16 %v239, %v238
    %256 = vmatprep.subr.bf16.mxu0 0
    %257 = vmatpush1.bf16.msra.mxu0 %v240
    %258 = vmatprep.subr.bf16.mxu0 0
    %259 = vmatpush1.bf16.msra.mxu0 %v241
    %260 = vmatprep.subr.bf16.mxu0 0
    %261 = vmatpush1.bf16.msra.mxu0 %v242
    %262 = vmatprep.subr.bf16.mxu0 0
    %263 = vmatpush1.bf16.msra.mxu0 %v243
    %264 = vmatprep.subr.bf16.mxu0 0
    %265 = vmatpush1.bf16.msra.mxu0 %v244
    %266 = vmatprep.subr.bf16.mxu0 0
    %267 = vmatpush1.bf16.msra.mxu0 %v245
    %268 = vmatprep.subr.bf16.mxu0 0
    %269 = vmatpush1.bf16.msra.mxu0 %v246
    %270 = vmatprep.subr.bf16.mxu0 0
    %271 = vmatpush1.bf16.msra.mxu0 %v247
    %272 = vmatprep.subr.bf16.mxu0 0
    %273 = vmatpush1.bf16.msra.mxu0 0
    %274 = vmatprep.subr.bf16.mxu0 0
    %275 = vmatpush1.bf16.msra.mxu0 0
    %276 = vmatprep.subr.bf16.mxu0 0
    %277 = vmatpush1.bf16.msra.mxu0 0
    %278 = vmatprep.subr.bf16.mxu0 0
    %279 = vmatpush1.bf16.msra.mxu0 0
    %280 = vmatprep.subr.bf16.mxu0 0
    %281 = vmatpush1.bf16.msra.mxu0 0
    %282 = vmatprep.subr.bf16.mxu0 0
    %283 = vmatpush1.bf16.msra.mxu0 0
    %284 = vmatprep.subr.bf16.mxu0 0
    %285 = vmatpush1.bf16.msra.mxu0 0
    %286 = vmatprep.subr.bf16.mxu0 0
    %287 = vmatpush1.bf16.msra.mxu0 0
    %288 = vmatprep.mubr.bf16.mxu0 0
    %289 = vmatmul.mubr.bf16.gmra.mrb[0].mxu0 %v187
    %v290 = vpop.f32.mrb[0].mxu0
    %v291 = vadd.f32 %v207, %v290
    %v292 = vpop.f32.mrb[0].mxu0
    %v293 = vpop.f32.mrb[0].mxu0
    %v294 = vpop.f32.mrb[0].mxu0
    %295 = vdwg.mxu0
    %v296 = vmax.f32 %v291, 0.0
    %v297 = vpack.c.bf16 %v296, %v296
    %v298 = vld [vmem:[#allocation8] sm:$0xf]
    %v299 = vld [vmem:[#allocation8 + $0x4] sm:$0xf]
    %v300 = vld [vmem:[#allocation8 + $0x8] sm:$0xf]
    %v301 = vld [vmem:[#allocation8 + $0xc] sm:$0xf]
    %v302 = vld [vmem:[#allocation8 + $0x10] sm:$0xf]
    %v303 = vld [vmem:[#allocation8 + $0x14] sm:$0xf]
    %v304 = vld [vmem:[#allocation8 + $0x18] sm:$0xf]
    %v305 = vld [vmem:[#allocation8 + $0x1c] sm:$0xf]
    %v306 = vld [vmem:[#allocation8 + $0x20] sm:$0xf]
    %v307 = vld [vmem:[#allocation8 + $0x24] sm:$0xf]
    %v308 = vld [vmem:[#allocation8 + $0x28] sm:$0xf]
    %v309 = vld [vmem:[#allocation8 + $0x2c] sm:$0xf]
    %v310 = vld [vmem:[#allocation8 + $0x30] sm:$0xf]
    %v311 = vld [vmem:[#allocation8 + $0x34] sm:$0xf]
    %v312 = vld [vmem:[#allocation8 + $0x38] sm:$0xf]
    %v313 = vld [vmem:[#allocation8 + $0x3c] sm:$0xf]
    %v314 = vlaneseq
    %v315 = vshrl.u32 %v314, 7
    %v316 = vsub.s32 2, %v315
    %v317 = vrot.slane %v75, %v316
    %v334 = vunpack.c.l.b16 %v298
    %v335 = vunpack.c.l.b16 %v299
    %v336 = vunpack.c.l.b16 %v300
    %v337 = vunpack.c.l.b16 %v301
    %v338 = vunpack.c.l.b16 %v302
    %v339 = vunpack.c.l.b16 %v303
    %v340 = vunpack.c.l.b16 %v304
    %v341 = vunpack.c.l.b16 %v305
    %v342 = vunpack.c.l.b16 %v306
    %v343 = vunpack.c.l.b16 %v307
    %v344 = vunpack.c.l.b16 %v308
    %v345 = vunpack.c.l.b16 %v309
    %v346 = vunpack.c.l.b16 %v310
    %v347 = vunpack.c.l.b16 %v311
    %v348 = vunpack.c.l.b16 %v312
    %v349 = vunpack.c.l.b16 %v313
    %v350 = vpack.c.b16 %v335, %v334
    %v351 = vpack.c.b16 %v337, %v336
    %v352 = vpack.c.b16 %v339, %v338
    %v353 = vpack.c.b16 %v341, %v340
    %v354 = vpack.c.b16 %v343, %v342
    %v355 = vpack.c.b16 %v345, %v344
    %v356 = vpack.c.b16 %v347, %v346
    %v357 = vpack.c.b16 %v349, %v348
    %366 = vmatprep.subr.bf16.mxu0 0
    %367 = vmatpush1.bf16.msra.mxu0 %v350
    %368 = vmatprep.subr.bf16.mxu0 0
    %369 = vmatpush1.bf16.msra.mxu0 %v351
    %370 = vmatprep.subr.bf16.mxu0 0
    %371 = vmatpush1.bf16.msra.mxu0 %v352
    %372 = vmatprep.subr.bf16.mxu0 0
    %373 = vmatpush1.bf16.msra.mxu0 %v353
    %374 = vmatprep.subr.bf16.mxu0 0
    %375 = vmatpush1.bf16.msra.mxu0 %v354
    %376 = vmatprep.subr.bf16.mxu0 0
    %377 = vmatpush1.bf16.msra.mxu0 %v355
    %378 = vmatprep.subr.bf16.mxu0 0
    %379 = vmatpush1.bf16.msra.mxu0 %v356
    %380 = vmatprep.subr.bf16.mxu0 0
    %381 = vmatpush1.bf16.msra.mxu0 %v357
    %382 = vmatprep.subr.bf16.mxu0 0
    %383 = vmatpush1.bf16.msra.mxu0 0
    %384 = vmatprep.subr.bf16.mxu0 0
    %385 = vmatpush1.bf16.msra.mxu0 0
    %386 = vmatprep.subr.bf16.mxu0 0
    %387 = vmatpush1.bf16.msra.mxu0 0
    %388 = vmatprep.subr.bf16.mxu0 0
    %389 = vmatpush1.bf16.msra.mxu0 0
    %390 = vmatprep.subr.bf16.mxu0 0
    %391 = vmatpush1.bf16.msra.mxu0 0
    %392 = vmatprep.subr.bf16.mxu0 0
    %393 = vmatpush1.bf16.msra.mxu0 0
    %394 = vmatprep.subr.bf16.mxu0 0
    %395 = vmatpush1.bf16.msra.mxu0 0
    %396 = vmatprep.subr.bf16.mxu0 0
    %397 = vmatpush1.bf16.msra.mxu0 0
    %398 = vmatprep.mubr.bf16.mxu0 0
    %399 = vmatmul.mubr.bf16.gmra.mrb[0].mxu0 %v297
    %v400 = vpop.f32.mrb[0].mxu0
    %v401 = vadd.f32 %v317, %v400
    %v402 = vpop.f32.mrb[0].mxu0
    %v403 = vpop.f32.mrb[0].mxu0
    %v404 = vpop.f32.mrb[0].mxu0
    %405 = vdwg.mxu0
    %406 = vst [vmem:[#allocation10] sm:$0xff] %v401
    // Predicated region
    $region38: #{tpu_custom_call.1} parent=1 // pred_check
      _
    $region39: #{tpu_custom_call.1} parent=1 // pred_check_branch
      %408 = sbr.rel (0) target = $region41
    $region40: #{tpu_custom_call.1} parent=1 // pred_region
      %s410 = ssub.s32 128, 128
      %411 = vsyncadd [#allocation4], %s410
      %s413 = sshll.u32 [#allocation10], 4
      %s414 = int_to_ptr.vmem [resolvable:$true] %s413
      %416 = dma.vmem_to_hbm [thread:$0]  %s414, 128, %s5, [#allocation4]
    $region41: #{tpu_custom_call.1} parent=1 // pred_fallthru
      _
    // Predicated region
    $region42: #{tpu_custom_call.1} parent=1 // pred_check
      _
    $region43: #{tpu_custom_call.1} parent=1 // pred_check_branch
      %418 = sbr.rel (0) target = $region45
    $region44: #{tpu_custom_call.1} parent=1 // pred_region
      %419 = dma.done [#allocation4], 128
    $region45: #{tpu_custom_call.1} parent=1 // pred_fallthru
      _
    %420 = vsyncpa [#allocation3], 1
    %421 = vsyncpa [#allocation6], 1
    %422 = vsyncpa [#allocation9], 1
    %423 = vsyncpa [#allocation4], 1

</llo_original>
